<compile_context>
chip_gen: v5e
topology: v5e:2x2
jax: 0.10.0
libtpu: 0.0.40
codegen_flags: <defaults>
</compile_context>

<pallas_src>
import jax
import jax.numpy as jnp
from jax.experimental import pallas as pl
from jax.experimental.pallas import tpu as pltpu


_STREAM_VMEM_BUDGET = 24 << 20   # bytes for the double-buffered streaming tiles
_MAX_BLOCK_B = 2048              # diminishing returns past ~2048 rows


def _round_up(x, m):
    return -(-x // m) * m


def _choose_block_b(B, row_bytes):
    """Pick the batch tile: as big as VMEM allows, >=2 (even) grid steps for large B."""
    cap = (_STREAM_VMEM_BUDGET // (2 * row_bytes)) // 8 * 8   # double-buffered
    cap = max(8, min(cap, _MAX_BLOCK_B))
    if B <= min(cap, 256):
        # Small batch: one full-extent block (legal for any B since it equals the dim).
        return B
    # Even number of steps (megacore on v7x), each tile under the VMEM cap, multiple of 8.
    n_steps = max(2, _round_up(pl.cdiv(B, cap), 2))
    return max(8, min(cap, _round_up(pl.cdiv(B, n_steps), 8)))


def _nonzero_avg(x3):
    """Mean over sequence rows that are not all-zero. x3: [bb, L, D] -> [bb, D] f32."""
    x3 = x3.astype(jnp.float32)
    row_nz = (jnp.sum(jnp.abs(x3), axis=-1, keepdims=True) > 0).astype(jnp.float32)  # [bb, L, 1]
    count = jnp.maximum(jnp.sum(row_nz, axis=1), 1.0)                                # [bb, 1]
    inv = 1.0 / count                                   # one reciprocal per row
    return jnp.sum(x3, axis=1) * inv                    # broadcast-multiply over D


def _avg_transformer_kernel(jamo_ref, word_ref, entity_ref,
                            wj_ref, ww_ref, we_ref, b_ref, o_ref):
    j = _nonzero_avg(jamo_ref[...])
    w = _nonzero_avg(word_ref[...])
    e = _nonzero_avg(entity_ref[...])

    # concat([j, w, e], -1) @ W  ==  j @ W[:Dj] + w @ W[Dj:Dj+Dw] + e @ W[Dj+Dw:]
    acc = jnp.dot(j, wj_ref[...], preferred_element_type=jnp.float32)
    acc = acc + jnp.dot(w, ww_ref[...], preferred_element_type=jnp.float32)
    acc = acc + jnp.dot(e, we_ref[...], preferred_element_type=jnp.float32)
    acc = acc + b_ref[...]                                   # [1, T] broadcasts over [bb, T]
    o_ref[...] = jnp.maximum(acc, 0.0).astype(o_ref.dtype)   # ReLU


def avg_transformer(jamo, word, entity, weight, bias, *, block_b=None):
    """Fused Pallas forward for AvgTransformer (use_stddev=False).

    jamo:   [B, Lj, Dj]   word: [B, Lw, Dw]   entity: [B, Le, De]   (f32 or bf16)
    weight: [Dj+Dw+De, T] bias: [T]           returns [B, T] float32
    """
    B, Lj, Dj = jamo.shape
    _, Lw, Dw = word.shape
    _, Le, De = entity.shape
    in_dim, T = weight.shape
    assert in_dim == Dj + Dw + De, "weight rows must equal Dj + Dw + De"

    def nbytes(a):
        return int(jnp.dtype(a.dtype).itemsize)

    # Bytes streamed per batch row (3 inputs + f32 output).
    row_bytes = (Lj * Dj * nbytes(jamo) + Lw * Dw * nbytes(word)
                 + Le * De * nbytes(entity) + T * 4)

    # Batch tile selection (no input padding; last block may be partial).
    if block_b is None:
        bb = _choose_block_b(B, row_bytes)
    else:
        bb = B if block_b >= B else max(8, (block_b // 8) * 8)
    grid = (pl.cdiv(B, bb),)

    # Split the linear weight by input segment (pure JAX, outside the kernel).
    wj = weight[:Dj]
    ww = weight[Dj:Dj + Dw]
    we = weight[Dj + Dw:]
    b2 = bias.reshape(1, T).astype(jnp.float32)

    # Scoped-VMEM limit sized for the chosen tile (v5e defaults to only 16 MiB;
    # cap at 48 MiB to stay under v7x's 64 MiB physical VMEM).
    resident_bytes = 2 * (weight.size * nbytes(weight) + T * 4)
    vmem_needed = 2 * bb * row_bytes + resident_bytes + (4 << 20)
    vmem_limit = int(min(48 << 20, max(vmem_needed, 32 << 20)))

    bytes_accessed = (jamo.size * nbytes(jamo) + word.size * nbytes(word)
                      + entity.size * nbytes(entity)
                      + weight.size * nbytes(weight) + bias.size * nbytes(bias)
                      + B * T * 4)

    out = pl.pallas_call(
        _avg_transformer_kernel,
        out_shape=jax.ShapeDtypeStruct((B, T), jnp.float32),
        grid_spec=pltpu.PrefetchScalarGridSpec(
            num_scalar_prefetch=0,
            grid=grid,
            in_specs=[
                pl.BlockSpec((bb, Lj, Dj), lambda i: (i, 0, 0)),
                pl.BlockSpec((bb, Lw, Dw), lambda i: (i, 0, 0)),
                pl.BlockSpec((bb, Le, De), lambda i: (i, 0, 0)),
                pl.BlockSpec((Dj, T), lambda i: (0, 0)),   # resident weights
                pl.BlockSpec((Dw, T), lambda i: (0, 0)),
                pl.BlockSpec((De, T), lambda i: (0, 0)),
                pl.BlockSpec((1, T), lambda i: (0, 0)),    # resident bias
            ],
            out_specs=pl.BlockSpec((bb, T), lambda i: (i, 0)),
        ),
        compiler_params=pltpu.CompilerParams(
            dimension_semantics=("parallel",),
            vmem_limit_bytes=vmem_limit,
        ),
        cost_estimate=pl.CostEstimate(
            flops=2 * B * in_dim * T,
            transcendentals=0,
            bytes_accessed=bytes_accessed,
        ),
    )(jamo, word, entity, wj, ww, we, b2)

    return out


def _reference(jamo, word, entity, weight, bias):
    """Pure-JAX reference matching the PyTorch forward (use_stddev=False)."""
    def nonzero_avg(x):
        x = x.astype(jnp.float32)
        mask = (jnp.abs(x).sum(-1) > 0).astype(jnp.float32)            # [B, L]
        count = jnp.maximum(mask.sum(-1, keepdims=True), 1.0)          # [B, 1]
        return x.sum(1) / count
    j = nonzero_avg(jamo)
    w = nonzero_avg(word)
    e = nonzero_avg(entity)
    x = jnp.concatenate([j, w, e], axis=-1)
    return jnp.maximum(x @ weight.astype(jnp.float32) + bias.astype(jnp.float32), 0.0)


if __name__ == "__main__":
    key = jax.random.PRNGKey(0)
    kj, kw, ke, kwt, kb, kj2, kw2, ke2 = jax.random.split(key, 8)

    # Small dims consistent with the module:
    #   jamo_embed_dim=32, er_output_dim=16, el_output_dim=16 -> in_dim = 32+32+32 = 96
    #   transform_dim=64, batch=2, seq=8
    B = 2
    Dj, Dw, De, T = 32, 2 * 16, 2 * 16, 64
    Lj, Lw, Le = 8, 8, 8

    jamo = jax.random.normal(kj, (B, Lj, Dj), dtype=jnp.float32)
    word = jax.random.normal(kw, (B, Lw, Dw), dtype=jnp.float32)
    entity = jax.random.normal(ke, (B, Le, De), dtype=jnp.float32)

    # Zero out trailing sequence positions (padding) so nonzero averaging is exercised.
    def pad_rows(x, lengths):
        L = x.shape[1]
        pos = jnp.arange(L)[None, :, None]
        return jnp.where(pos < jnp.asarray(lengths)[:, None, None], x, 0.0)

    jamo = pad_rows(jamo, [5, 7])
    word = pad_rows(word, [3, 8])
    entity = pad_rows(entity, [6, 2])

    weight = 0.1 * jax.random.normal(kwt, (Dj + Dw + De, T), dtype=jnp.float32)
    bias = 0.1 * jax.random.normal(kb, (T,), dtype=jnp.float32)

    y = jax.block_until_ready(avg_transformer(jamo, word, entity, weight, bias))
    y_ref = _reference(jamo, word, entity, weight, bias)
    assert y.shape == (B, T) and y.dtype == jnp.float32
    assert jnp.allclose(y, y_ref, atol=5e-5, rtol=5e-5)

    # Second check: larger, non-multiple batch exercising the multi-step grid with a
    # PARTIAL last batch block (no wrapper-side padding, no output slice).
    B2 = 300
    jamo2 = pad_rows(jax.random.normal(kj2, (B2, Lj, Dj), dtype=jnp.float32),
                     [int(1 + i % Lj) for i in range(B2)])
    word2 = pad_rows(jax.random.normal(kw2, (B2, Lw, Dw), dtype=jnp.float32),
                     [int(1 + (i * 3) % Lw) for i in range(B2)])
    entity2 = pad_rows(jax.random.normal(ke2, (B2, Le, De), dtype=jnp.float32),
                       [int(1 + (i * 5) % Le) for i in range(B2)])

    y2 = jax.block_until_ready(avg_transformer(jamo2, word2, entity2, weight, bias))
    y2_ref = _reference(jamo2, word2, entity2, weight, bias)
    assert y2.shape == (B2, T)
    assert jnp.allclose(y2, y2_ref, atol=5e-5, rtol=5e-5)

    print("KERNEL_OK")
</pallas_src>

<mosaic_0001>
module attributes {stable_mosaic.version = 11 : i64} {
  func.func @_avg_transformer_kernel(%arg0: i32, %arg1: memref<2x8x32xf32, #tpu.memory_space<vmem>>, %arg2: memref<2x8x32xf32, #tpu.memory_space<vmem>>, %arg3: memref<2x8x32xf32, #tpu.memory_space<vmem>>, %arg4: memref<32x64xf32, #tpu.memory_space<vmem>>, %arg5: memref<32x64xf32, #tpu.memory_space<vmem>>, %arg6: memref<32x64xf32, #tpu.memory_space<vmem>>, %arg7: memref<1x64xf32, #tpu.memory_space<vmem>>, %arg8: memref<2x64xf32, #tpu.memory_space<vmem>>) attributes {dimension_semantics = [#tpu.dimension_semantics<parallel>], iteration_bounds = array<i64: 1>, scalar_prefetch = 0 : i64, scratch_operands = 0 : i64, tpu.core_type = #tpu.core_type<tc>, window_params = [{transform_indices = @transform_0, window_bounds = array<i64: 2, 8, 32>}, {transform_indices = @transform_1, window_bounds = array<i64: 2, 8, 32>}, {transform_indices = @transform_2, window_bounds = array<i64: 2, 8, 32>}, {pipeline_mode = #tpu.pipeline_mode<synchronous>, transform_indices = @transform_3, window_bounds = array<i64: 32, 64>}, {pipeline_mode = #tpu.pipeline_mode<synchronous>, transform_indices = @transform_4, window_bounds = array<i64: 32, 64>}, {pipeline_mode = #tpu.pipeline_mode<synchronous>, transform_indices = @transform_5, window_bounds = array<i64: 32, 64>}, {pipeline_mode = #tpu.pipeline_mode<synchronous>, transform_indices = @transform_6, window_bounds = array<i64: 1, 64>}, {transform_indices = @transform_7, window_bounds = array<i64: 2, 64>}]} {
    %c0 = arith.constant 0 : index
    %c0_0 = arith.constant 0 : index
    %c0_1 = arith.constant 0 : index
    %0 = vector.load %arg1[%c0, %c0_0, %c0_1] : memref<2x8x32xf32, #tpu.memory_space<vmem>>, vector<2x8x32xf32>
    %1 = math.absf %0 : vector<2x8x32xf32>
    %cst = arith.constant dense<0.000000e+00> : vector<2x8xf32>
    %2 = vector.multi_reduction <add>, %1, %cst [2] : vector<2x8x32xf32> to vector<2x8xf32>
    %3 = vector.shape_cast %2 : vector<2x8xf32> to vector<2x8x1xf32>
    %cst_2 = arith.constant 0.000000e+00 : f32
    %4 = vector.broadcast %cst_2 : f32 to vector<2x8x1xf32>
    %5 = arith.cmpf ogt, %3, %4 : vector<2x8x1xf32>
    %6 = arith.extui %5 : vector<2x8x1xi1> to vector<2x8x1xi32>
    %7 = arith.sitofp %6 : vector<2x8x1xi32> to vector<2x8x1xf32>
    %cst_3 = arith.constant dense<0.000000e+00> : vector<2x1xf32>
    %8 = vector.multi_reduction <add>, %7, %cst_3 [1] : vector<2x8x1xf32> to vector<2x1xf32>
    %cst_4 = arith.constant 1.000000e+00 : f32
    %9 = vector.broadcast %cst_4 : f32 to vector<2x1xf32>
    %10 = arith.maximumf %8, %9 : vector<2x1xf32>
    %cst_5 = arith.constant 1.000000e+00 : f32
    %11 = vector.broadcast %cst_5 : f32 to vector<2x1xf32>
    %12 = arith.divf %11, %10 : vector<2x1xf32>
    %cst_6 = arith.constant dense<0.000000e+00> : vector<2x32xf32>
    %13 = vector.multi_reduction <add>, %0, %cst_6 [1] : vector<2x8x32xf32> to vector<2x32xf32>
    %14 = vector.broadcast %12 : vector<2x1xf32> to vector<2x32xf32>
    %15 = arith.mulf %13, %14 : vector<2x32xf32>
    %c0_7 = arith.constant 0 : index
    %c0_8 = arith.constant 0 : index
    %c0_9 = arith.constant 0 : index
    %16 = vector.load %arg2[%c0_7, %c0_8, %c0_9] : memref<2x8x32xf32, #tpu.memory_space<vmem>>, vector<2x8x32xf32>
    %17 = math.absf %16 : vector<2x8x32xf32>
    %cst_10 = arith.constant dense<0.000000e+00> : vector<2x8xf32>
    %18 = vector.multi_reduction <add>, %17, %cst_10 [2] : vector<2x8x32xf32> to vector<2x8xf32>
    %19 = vector.shape_cast %18 : vector<2x8xf32> to vector<2x8x1xf32>
    %cst_11 = arith.constant 0.000000e+00 : f32
    %20 = vector.broadcast %cst_11 : f32 to vector<2x8x1xf32>
    %21 = arith.cmpf ogt, %19, %20 : vector<2x8x1xf32>
    %22 = arith.extui %21 : vector<2x8x1xi1> to vector<2x8x1xi32>
    %23 = arith.sitofp %22 : vector<2x8x1xi32> to vector<2x8x1xf32>
    %cst_12 = arith.constant dense<0.000000e+00> : vector<2x1xf32>
    %24 = vector.multi_reduction <add>, %23, %cst_12 [1] : vector<2x8x1xf32> to vector<2x1xf32>
    %cst_13 = arith.constant 1.000000e+00 : f32
    %25 = vector.broadcast %cst_13 : f32 to vector<2x1xf32>
    %26 = arith.maximumf %24, %25 : vector<2x1xf32>
    %cst_14 = arith.constant 1.000000e+00 : f32
    %27 = vector.broadcast %cst_14 : f32 to vector<2x1xf32>
    %28 = arith.divf %27, %26 : vector<2x1xf32>
    %cst_15 = arith.constant dense<0.000000e+00> : vector<2x32xf32>
    %29 = vector.multi_reduction <add>, %16, %cst_15 [1] : vector<2x8x32xf32> to vector<2x32xf32>
    %30 = vector.broadcast %28 : vector<2x1xf32> to vector<2x32xf32>
    %31 = arith.mulf %29, %30 : vector<2x32xf32>
    %c0_16 = arith.constant 0 : index
    %c0_17 = arith.constant 0 : index
    %c0_18 = arith.constant 0 : index
    %32 = vector.load %arg3[%c0_16, %c0_17, %c0_18] : memref<2x8x32xf32, #tpu.memory_space<vmem>>, vector<2x8x32xf32>
    %33 = math.absf %32 : vector<2x8x32xf32>
    %cst_19 = arith.constant dense<0.000000e+00> : vector<2x8xf32>
    %34 = vector.multi_reduction <add>, %33, %cst_19 [2] : vector<2x8x32xf32> to vector<2x8xf32>
    %35 = vector.shape_cast %34 : vector<2x8xf32> to vector<2x8x1xf32>
    %cst_20 = arith.constant 0.000000e+00 : f32
    %36 = vector.broadcast %cst_20 : f32 to vector<2x8x1xf32>
    %37 = arith.cmpf ogt, %35, %36 : vector<2x8x1xf32>
    %38 = arith.extui %37 : vector<2x8x1xi1> to vector<2x8x1xi32>
    %39 = arith.sitofp %38 : vector<2x8x1xi32> to vector<2x8x1xf32>
    %cst_21 = arith.constant dense<0.000000e+00> : vector<2x1xf32>
    %40 = vector.multi_reduction <add>, %39, %cst_21 [1] : vector<2x8x1xf32> to vector<2x1xf32>
    %cst_22 = arith.constant 1.000000e+00 : f32
    %41 = vector.broadcast %cst_22 : f32 to vector<2x1xf32>
    %42 = arith.maximumf %40, %41 : vector<2x1xf32>
    %cst_23 = arith.constant 1.000000e+00 : f32
    %43 = vector.broadcast %cst_23 : f32 to vector<2x1xf32>
    %44 = arith.divf %43, %42 : vector<2x1xf32>
    %cst_24 = arith.constant dense<0.000000e+00> : vector<2x32xf32>
    %45 = vector.multi_reduction <add>, %32, %cst_24 [1] : vector<2x8x32xf32> to vector<2x32xf32>
    %46 = vector.broadcast %44 : vector<2x1xf32> to vector<2x32xf32>
    %47 = arith.mulf %45, %46 : vector<2x32xf32>
    %c0_25 = arith.constant 0 : index
    %c0_26 = arith.constant 0 : index
    %48 = vector.load %arg4[%c0_25, %c0_26] : memref<32x64xf32, #tpu.memory_space<vmem>>, vector<32x64xf32>
    %cst_27 = arith.constant dense<0.000000e+00> : vector<2x64xf32>
    %49 = tpu.matmul %15, %48, %cst_27 {dimension_numbers = #tpu.dot_dimension_numbers<[1], [0], [0], [1], [0, 0, 1, 1], [], []>} : vector<2x32xf32>, vector<32x64xf32>, vector<2x64xf32> -> vector<2x64xf32>
    %c0_28 = arith.constant 0 : index
    %c0_29 = arith.constant 0 : index
    %50 = vector.load %arg5[%c0_28, %c0_29] : memref<32x64xf32, #tpu.memory_space<vmem>>, vector<32x64xf32>
    %cst_30 = arith.constant dense<0.000000e+00> : vector<2x64xf32>
    %51 = tpu.matmul %31, %50, %cst_30 {dimension_numbers = #tpu.dot_dimension_numbers<[1], [0], [0], [1], [0, 0, 1, 1], [], []>} : vector<2x32xf32>, vector<32x64xf32>, vector<2x64xf32> -> vector<2x64xf32>
    %52 = arith.addf %49, %51 : vector<2x64xf32>
    %c0_31 = arith.constant 0 : index
    %c0_32 = arith.constant 0 : index
    %53 = vector.load %arg6[%c0_31, %c0_32] : memref<32x64xf32, #tpu.memory_space<vmem>>, vector<32x64xf32>
    %cst_33 = arith.constant dense<0.000000e+00> : vector<2x64xf32>
    %54 = tpu.matmul %47, %53, %cst_33 {dimension_numbers = #tpu.dot_dimension_numbers<[1], [0], [0], [1], [0, 0, 1, 1], [], []>} : vector<2x32xf32>, vector<32x64xf32>, vector<2x64xf32> -> vector<2x64xf32>
    %55 = arith.addf %52, %54 : vector<2x64xf32>
    %c0_34 = arith.constant 0 : index
    %c0_35 = arith.constant 0 : index
    %56 = vector.load %arg7[%c0_34, %c0_35] : memref<1x64xf32, #tpu.memory_space<vmem>>, vector<1x64xf32>
    %57 = vector.broadcast %56 : vector<1x64xf32> to vector<2x64xf32>
    %58 = arith.addf %55, %57 : vector<2x64xf32>
    %cst_36 = arith.constant 0.000000e+00 : f32
    %59 = vector.broadcast %cst_36 : f32 to vector<2x64xf32>
    %60 = arith.maximumf %58, %59 : vector<2x64xf32>
    %c0_37 = arith.constant 0 : index
    %c0_38 = arith.constant 0 : index
    %61 = vector.load %arg8[%c0_37, %c0_38] : memref<2x64xf32, #tpu.memory_space<vmem>>, vector<2x64xf32>
    tpu.vector_store %arg8[%c0_37, %c0_38], %60 {strides = array<i32>} : memref<2x64xf32, #tpu.memory_space<vmem>>, vector<2x64xf32>,
    return
  }
  func.func @transform_0(%arg0: i32) -> (i32, i32, i32) {
    %c0_i32 = arith.constant 0 : i32
    %c0_i32_0 = arith.constant 0 : i32
    %c0_i32_1 = arith.constant 0 : i32
    return %arg0, %c0_i32, %c0_i32_0 : i32, i32, i32
  }
  func.func @transform_1(%arg0: i32) -> (i32, i32, i32) {
    %c0_i32 = arith.constant 0 : i32
    %c0_i32_0 = arith.constant 0 : i32
    %c0_i32_1 = arith.constant 0 : i32
    return %arg0, %c0_i32, %c0_i32_0 : i32, i32, i32
  }
  func.func @transform_2(%arg0: i32) -> (i32, i32, i32) {
    %c0_i32 = arith.constant 0 : i32
    %c0_i32_0 = arith.constant 0 : i32
    %c0_i32_1 = arith.constant 0 : i32
    return %arg0, %c0_i32, %c0_i32_0 : i32, i32, i32
  }
  func.func @transform_3(%arg0: i32) -> (i32, i32) {
    %c0_i32 = arith.constant 0 : i32
    %c0_i32_0 = arith.constant 0 : i32
    %c0_i32_1 = arith.constant 0 : i32
    return %c0_i32, %c0_i32_0 : i32, i32
  }
  func.func @transform_4(%arg0: i32) -> (i32, i32) {
    %c0_i32 = arith.constant 0 : i32
    %c0_i32_0 = arith.constant 0 : i32
    %c0_i32_1 = arith.constant 0 : i32
    return %c0_i32, %c0_i32_0 : i32, i32
  }
  func.func @transform_5(%arg0: i32) -> (i32, i32) {
    %c0_i32 = arith.constant 0 : i32
    %c0_i32_0 = arith.constant 0 : i32
    %c0_i32_1 = arith.constant 0 : i32
    return %c0_i32, %c0_i32_0 : i32, i32
  }
  func.func @transform_6(%arg0: i32) -> (i32, i32) {
    %c0_i32 = arith.constant 0 : i32
    %c0_i32_0 = arith.constant 0 : i32
    %c0_i32_1 = arith.constant 0 : i32
    return %c0_i32, %c0_i32_0 : i32, i32
  }
  func.func @transform_7(%arg0: i32) -> (i32, i32) {
    %c0_i32 = arith.constant 0 : i32
    %c0_i32_0 = arith.constant 0 : i32
    return %arg0, %c0_i32 : i32, i32
  }
}

</mosaic_0001>

<llo_original>
// kernel: tpu_custom_call.1
$region0: #{tpu_custom_call.1}
  #allocation0 [shape = 'u32[]', space=smem, size = 0x4, offset = 0x4, fixed_abs, tag = 'smem constant byte address 0x4 - core index']
  #allocation1 [shape = 'u32[72,128]{1,0:T(1,128)}', space=vmem, size = 0x9000, scoped, tag = 'internal scratch']
  %s0 = inlined_call_operand.hbm [shape: f32[2,8,32], index: 0, kind: input, shape index: {}]
  %s1 = inlined_call_operand.hbm [shape: f32[2,8,32], index: 1, kind: input, shape index: {}]
  %s2 = inlined_call_operand.hbm [shape: f32[2,8,32], index: 2, kind: input, shape index: {}]
  %s3 = inlined_call_operand.hbm [shape: f32[32,64], index: 3, kind: input, shape index: {}]
  %s4 = inlined_call_operand.hbm [shape: f32[32,64], index: 4, kind: input, shape index: {}]
  %s5 = inlined_call_operand.hbm [shape: f32[32,64], index: 5, kind: input, shape index: {}]
  %s6 = inlined_call_operand.vmem [shape: f32[1,64], index: 6, kind: input, shape index: {}]
  %s7 = inlined_call_operand.hbm [shape: f32[2,64], index: 7, kind: output, shape index: {}]
  %s8 = sld [smem:[#allocation0]]
  $region62: #{tpu_custom_call.1} parent=0
    _
  %s10 = ssub.s32 1, %s8
  %s11 = scalar_select 0, %s10, %s8
  $region1: #{tpu_custom_call.1} parent=0
    #allocation2 [shape = 'u8[8192]{0}', space=vmem, size = 0x2000, scoped, tag = 'input window, operand 0, single buffered']
    #allocation3 [shape = 's32[1]{0}', space=sflag, size = 0x4, scoped, tag = 'scoped memory for tpu_custom_call.1']
    #allocation4 [shape = 's32[1]{0}', space=sflag, size = 0x4, scoped, tag = 'scoped memory for tpu_custom_call.1']
    #allocation5 [shape = 'u8[8192]{0}', space=vmem, size = 0x2000, scoped, tag = 'input window, operand 1, single buffered']
    #allocation6 [shape = 's32[1]{0}', space=sflag, size = 0x4, scoped, tag = 'scoped memory for tpu_custom_call.1']
    #allocation7 [shape = 'u8[8192]{0}', space=vmem, size = 0x2000, scoped, tag = 'input window, operand 2, single buffered']
    #allocation8 [shape = 'u8[16384]{0}', space=vmem, size = 0x4000, scoped, tag = 'input window, operand 3, single buffered']
    #allocation9 [shape = 's32[1]{0}', space=sflag, size = 0x4, scoped, tag = 'scoped memory for tpu_custom_call.1']
    #allocation10 [shape = 'u8[16384]{0}', space=vmem, size = 0x4000, scoped, tag = 'input window, operand 4, single buffered']
    #allocation11 [shape = 'u8[16384]{0}', space=vmem, size = 0x4000, scoped, tag = 'input window, operand 5, single buffered']
    #allocation12 [shape = 's32[1]{0}', space=sflag, size = 0x4, scoped, tag = 'scoped memory for tpu_custom_call.1']
    #allocation13 [shape = 'u8[1024]{0}', space=vmem, size = 0x400, scoped, tag = 'output window, operand 0, single buffered']
    %12 = vsyncpa [#allocation3], 0
    %13 = vsyncpa [#allocation6], 0
    %14 = vsyncpa [#allocation9], 0
    %15 = vsyncpa [#allocation12], 0
    %16 = vsyncpa [#allocation4], 0
    // Predicated region
    $region2: #{tpu_custom_call.1} parent=1 // pred_check
      _
    $region3: #{tpu_custom_call.1} parent=1 // pred_check_branch
      %18 = sbr.rel (0) target = $region5
    $region4: #{tpu_custom_call.1} parent=1 // pred_region
      %20 = vsyncadd [#allocation3], 0
      %s21 = sshll.u32 %s0, 4
      %s22 = int_to_ptr.hbm [resolvable:$true] %s21
      %s23 = sshll.u32 [#allocation2], 4
      %s24 = int_to_ptr.vmem [resolvable:$true] %s23
      %29 = dma.hbm_to_vmem [thread:$0]  %s22, 256, %s24, [#allocation3], 128, 128, 8
    $region5: #{tpu_custom_call.1} parent=1 // pred_fallthru
      _
    // Predicated region
    $region6: #{tpu_custom_call.1} parent=1 // pred_check
      _
    $region7: #{tpu_custom_call.1} parent=1 // pred_check_branch
      %31 = sbr.rel (0) target = $region9
    $region8: #{tpu_custom_call.1} parent=1 // pred_region
      %33 = vsyncadd [#allocation6], 0
      %s34 = sshll.u32 %s1, 4
      %s35 = int_to_ptr.hbm [resolvable:$true] %s34
      %s36 = sshll.u32 [#allocation5], 4
      %s37 = int_to_ptr.vmem [resolvable:$true] %s36
      %42 = dma.hbm_to_vmem [thread:$0]  %s35, 256, %s37, [#allocation6], 128, 128, 8
    $region9: #{tpu_custom_call.1} parent=1 // pred_fallthru
      _
    // Predicated region
    $region10: #{tpu_custom_call.1} parent=1 // pred_check
      _
    $region11: #{tpu_custom_call.1} parent=1 // pred_check_branch
      %44 = sbr.rel (0) target = $region13
    $region12: #{tpu_custom_call.1} parent=1 // pred_region
      %46 = vsyncadd [#allocation6], 0
      %s47 = sshll.u32 %s2, 4
      %s48 = int_to_ptr.hbm [resolvable:$true] %s47
      %s49 = sshll.u32 [#allocation7], 4
      %s50 = int_to_ptr.vmem [resolvable:$true] %s49
      %55 = dma.hbm_to_vmem [thread:$0]  %s48, 256, %s50, [#allocation6], 128, 128, 8
    $region13: #{tpu_custom_call.1} parent=1 // pred_fallthru
      _
    // Predicated region
    $region14: #{tpu_custom_call.1} parent=1 // pred_check
      _
    $region15: #{tpu_custom_call.1} parent=1 // pred_check_branch
      %57 = sbr.rel (0) target = $region17
    $region16: #{tpu_custom_call.1} parent=1 // pred_region
      %59 = vsyncadd [#allocation9], 0
      %s60 = sshll.u32 %s3, 4
      %s61 = int_to_ptr.hbm [resolvable:$true] %s60
      %s62 = sshll.u32 [#allocation8], 4
      %s63 = int_to_ptr.vmem [resolvable:$true] %s62
      %68 = dma.hbm_to_vmem [thread:$0]  %s61, 512, %s63, [#allocation9], 128, 128, 8
    $region17: #{tpu_custom_call.1} parent=1 // pred_fallthru
      _
    // Predicated region
    $region18: #{tpu_custom_call.1} parent=1 // pred_check
      _
    $region19: #{tpu_custom_call.1} parent=1 // pred_check_branch
      %70 = sbr.rel (0) target = $region21
    $region20: #{tpu_custom_call.1} parent=1 // pred_region
      %72 = vsyncadd [#allocation9], 0
      %s73 = sshll.u32 %s4, 4
      %s74 = int_to_ptr.hbm [resolvable:$true] %s73
      %s75 = sshll.u32 [#allocation10], 4
      %s76 = int_to_ptr.vmem [resolvable:$true] %s75
      %81 = dma.hbm_to_vmem [thread:$0]  %s74, 512, %s76, [#allocation9], 128, 128, 8
    $region21: #{tpu_custom_call.1} parent=1 // pred_fallthru
      _
    // Predicated region
    $region22: #{tpu_custom_call.1} parent=1 // pred_check
      _
    $region23: #{tpu_custom_call.1} parent=1 // pred_check_branch
      %83 = sbr.rel (0) target = $region25
    $region24: #{tpu_custom_call.1} parent=1 // pred_region
      %85 = vsyncadd [#allocation12], 0
      %s86 = sshll.u32 %s5, 4
      %s87 = int_to_ptr.hbm [resolvable:$true] %s86
      %s88 = sshll.u32 [#allocation11], 4
      %s89 = int_to_ptr.vmem [resolvable:$true] %s88
      %94 = dma.hbm_to_vmem [thread:$0]  %s87, 512, %s89, [#allocation12], 128, 128, 8
    $region25: #{tpu_custom_call.1} parent=1 // pred_fallthru
      _
    // Predicated region
    $region26: #{tpu_custom_call.1} parent=1 // pred_check
      _
    $region27: #{tpu_custom_call.1} parent=1 // pred_check_branch
      %96 = sbr.rel (0) target = $region29
    $region28: #{tpu_custom_call.1} parent=1 // pred_region
      _
    $region29: #{tpu_custom_call.1} parent=1 // pred_fallthru
      _
    // Predicated region
    $region30: #{tpu_custom_call.1} parent=1 // pred_check
      _
    $region31: #{tpu_custom_call.1} parent=1 // pred_check_branch
      %98 = sbr.rel (0) target = $region33
    $region32: #{tpu_custom_call.1} parent=1 // pred_region
      %100 = dma.done [#allocation3], 256
    $region33: #{tpu_custom_call.1} parent=1 // pred_fallthru
      _
    // Predicated region
    $region34: #{tpu_custom_call.1} parent=1 // pred_check
      _
    $region35: #{tpu_custom_call.1} parent=1 // pred_check_branch
      %102 = sbr.rel (0) target = $region37
    $region36: #{tpu_custom_call.1} parent=1 // pred_region
      %104 = dma.done [#allocation6], 256
    $region37: #{tpu_custom_call.1} parent=1 // pred_fallthru
      _
    // Predicated region
    $region38: #{tpu_custom_call.1} parent=1 // pred_check
      _
    $region39: #{tpu_custom_call.1} parent=1 // pred_check_branch
      %106 = sbr.rel (0) target = $region41
    $region40: #{tpu_custom_call.1} parent=1 // pred_region
      %108 = dma.done [#allocation6], 256
    $region41: #{tpu_custom_call.1} parent=1 // pred_fallthru
      _
    // Predicated region
    $region42: #{tpu_custom_call.1} parent=1 // pred_check
      _
    $region43: #{tpu_custom_call.1} parent=1 // pred_check_branch
      %110 = sbr.rel (0) target = $region45
    $region44: #{tpu_custom_call.1} parent=1 // pred_region
      %112 = dma.done [#allocation9], 512
    $region45: #{tpu_custom_call.1} parent=1 // pred_fallthru
      _
    // Predicated region
    $region46: #{tpu_custom_call.1} parent=1 // pred_check
      _
    $region47: #{tpu_custom_call.1} parent=1 // pred_check_branch
      %114 = sbr.rel (0) target = $region49
    $region48: #{tpu_custom_call.1} parent=1 // pred_region
      %116 = dma.done [#allocation9], 512
    $region49: #{tpu_custom_call.1} parent=1 // pred_fallthru
      _
    // Predicated region
    $region50: #{tpu_custom_call.1} parent=1 // pred_check
      _
    $region51: #{tpu_custom_call.1} parent=1 // pred_check_branch
      %118 = sbr.rel (0) target = $region53
    $region52: #{tpu_custom_call.1} parent=1 // pred_region
      %120 = dma.done [#allocation12], 512
    $region53: #{tpu_custom_call.1} parent=1 // pred_fallthru
      _
    %v121 = vld [vmem:[#allocation2] sm:$0xff]
    %v122 = vld [vmem:[#allocation2 + $0x8] sm:$0xff]
    %v123 = vand.u32 2147483647, %v121
    %v124 = vand.u32 2147483647, %v122
    %vm125 = vcmask 261120
    %v126 = vsel %vm125, %v123, 0.0
    %127 = vadd.xlane.f32.xlu0 %v126
    %v128 = vpop.xlane.xlu0 %127
    %v129 = vsel %vm125, %v124, 0.0
    %130 = vadd.xlane.f32.xlu0 %v129
    %v131 = vpop.xlane.xlu0 %130
    %vm132 = vcmp.gt.f32.partialorder %v128, 0.0
    %vm133 = vcmp.gt.f32.partialorder %v131, 0.0
    %v134 = vsel %vm132, 1, 0
    %v135 = vsel %vm133, 1, 0
    %v136 = vcvt.s32.f32 %v134
    %v137 = vcvt.s32.f32 %v135
    %v138 = vrot.slane %v136, 4
    %v139 = vadd.f32 %v136, %v138
    %v140 = vrot.slane %v139, 2
    %v141 = vadd.f32 %v139, %v140
    %v142 = vrot.slane %v141, 1
    %v143 = vadd.f32 %v141, %v142
    %v144 = vrot.slane %v137, 4
    %v145 = vadd.f32 %v137, %v144
    %v146 = vrot.slane %v145, 2
    %v147 = vadd.f32 %v145, %v146
    %v148 = vrot.slane %v147, 1
    %v149 = vadd.f32 %v147, %v148
    %v150 = vmax.f32 %v143, 1.0
    %v151 = vmax.f32 %v149, 1.0
    %v152 = vrcp.pop %v150
    %v153 = vmul.f32 %v150, %v152
    %v154 = vsub.f32 1.0, %v153
    %v155 = vmul.f32 %v152, %v154
    %v156 = vadd.f32 %v152, %v155
    %vm157 = vweird.f32 %v150
    %vm158 = vweird.f32 %v152
    %vm159 = vmor %vm157, %vm158
    %v160 = vsel %vm159, %v152, %v156
    %v161 = vand.u32 2147483647, %v150
    %vm162 = vcmp.eq.f32.partialorder %v161, 8.507059e+37
    %v163 = vand.u32 %v150, 2147483648
    %v164 = vor.u32 1.1754944e-38, %v163
    %v165 = vsel %vm162, %v164, %v160
    %v166 = vmul.f32 1.0, %v165
    %v167 = vrcp.pop %v151
    %v168 = vmul.f32 %v151, %v167
    %v169 = vsub.f32 1.0, %v168
    %v170 = vmul.f32 %v167, %v169
    %v171 = vadd.f32 %v167, %v170
    %vm172 = vweird.f32 %v151
    %vm173 = vweird.f32 %v167
    %vm174 = vmor %vm172, %vm173
    %v175 = vsel %vm174, %v167, %v171
    %v176 = vand.u32 2147483647, %v151
    %vm177 = vcmp.eq.f32.partialorder %v176, 8.507059e+37
    %v178 = vand.u32 %v151, 2147483648
    %v179 = vor.u32 1.1754944e-38, %v178
    %v180 = vsel %vm177, %v179, %v175
    %v181 = vmul.f32 1.0, %v180
    %v182 = vsel %vm125, %v121, 0.0
    %v183 = vrot.slane %v182, 4
    %v184 = vadd.f32 %v182, %v183
    %v185 = vrot.slane %v184, 2
    %v186 = vadd.f32 %v184, %v185
    %v187 = vrot.slane %v186, 1
    %v188 = vadd.f32 %v186, %v187
    %v189 = vsel %vm125, %v122, 0.0
    %v190 = vrot.slane %v189, 4
    %v191 = vadd.f32 %v189, %v190
    %v192 = vrot.slane %v191, 2
    %v193 = vadd.f32 %v191, %v192
    %v194 = vrot.slane %v193, 1
    %v195 = vadd.f32 %v193, %v194
    %v196 = vmul.f32 %v188, %v166
    %v197 = vmul.f32 %v195, %v181
    %v198 = vld [vmem:[#allocation5] sm:$0xff]
    %v199 = vld [vmem:[#allocation5 + $0x8] sm:$0xff]
    %v200 = vand.u32 2147483647, %v198
    %v201 = vand.u32 2147483647, %v199
    %v202 = vsel %vm125, %v200, 0.0
    %203 = vadd.xlane.f32.xlu0 %v202
    %v204 = vpop.xlane.xlu0 %203
    %v205 = vsel %vm125, %v201, 0.0
    %206 = vadd.xlane.f32.xlu0 %v205
    %v207 = vpop.xlane.xlu0 %206
    %vm208 = vcmp.gt.f32.partialorder %v204, 0.0
    %vm209 = vcmp.gt.f32.partialorder %v207, 0.0
    %v210 = vsel %vm208, 1, 0
    %v211 = vsel %vm209, 1, 0
    %v212 = vcvt.s32.f32 %v210
    %v213 = vcvt.s32.f32 %v211
    %v214 = vrot.slane %v212, 4
    %v215 = vadd.f32 %v212, %v214
    %v216 = vrot.slane %v215, 2
    %v217 = vadd.f32 %v215, %v216
    %v218 = vrot.slane %v217, 1
    %v219 = vadd.f32 %v217, %v218
    %v220 = vrot.slane %v213, 4
    %v221 = vadd.f32 %v213, %v220
    %v222 = vrot.slane %v221, 2
    %v223 = vadd.f32 %v221, %v222
    %v224 = vrot.slane %v223, 1
    %v225 = vadd.f32 %v223, %v224
    %v226 = vmax.f32 %v219, 1.0
    %v227 = vmax.f32 %v225, 1.0
    %v228 = vrcp.pop %v226
    %v229 = vmul.f32 %v226, %v228
    %v230 = vsub.f32 1.0, %v229
    %v231 = vmul.f32 %v228, %v230
    %v232 = vadd.f32 %v228, %v231
    %vm233 = vweird.f32 %v226
    %vm234 = vweird.f32 %v228
    %vm235 = vmor %vm233, %vm234
    %v236 = vsel %vm235, %v228, %v232
    %v237 = vand.u32 2147483647, %v226
    %vm238 = vcmp.eq.f32.partialorder %v237, 8.507059e+37
    %v239 = vand.u32 %v226, 2147483648
    %v240 = vor.u32 1.1754944e-38, %v239
    %v241 = vsel %vm238, %v240, %v236
    %v242 = vmul.f32 1.0, %v241
    %v243 = vrcp.pop %v227
    %v244 = vmul.f32 %v227, %v243
    %v245 = vsub.f32 1.0, %v244
    %v246 = vmul.f32 %v243, %v245
    %v247 = vadd.f32 %v243, %v246
    %vm248 = vweird.f32 %v227
    %vm249 = vweird.f32 %v243
    %vm250 = vmor %vm248, %vm249
    %v251 = vsel %vm250, %v243, %v247
    %v252 = vand.u32 2147483647, %v227
    %vm253 = vcmp.eq.f32.partialorder %v252, 8.507059e+37
    %v254 = vand.u32 %v227, 2147483648
    %v255 = vor.u32 1.1754944e-38, %v254
    %v256 = vsel %vm253, %v255, %v251
    %v257 = vmul.f32 1.0, %v256
    %v258 = vsel %vm125, %v198, 0.0
    %v259 = vrot.slane %v258, 4
    %v260 = vadd.f32 %v258, %v259
    %v261 = vrot.slane %v260, 2
    %v262 = vadd.f32 %v260, %v261
    %v263 = vrot.slane %v262, 1
    %v264 = vadd.f32 %v262, %v263
    %v265 = vsel %vm125, %v199, 0.0
    %v266 = vrot.slane %v265, 4
    %v267 = vadd.f32 %v265, %v266
    %v268 = vrot.slane %v267, 2
    %v269 = vadd.f32 %v267, %v268
    %v270 = vrot.slane %v269, 1
    %v271 = vadd.f32 %v269, %v270
    %v272 = vmul.f32 %v264, %v242
    %v273 = vmul.f32 %v271, %v257
    %v274 = vld [vmem:[#allocation7] sm:$0xff]
    %v275 = vld [vmem:[#allocation7 + $0x8] sm:$0xff]
    %v276 = vand.u32 2147483647, %v274
    %v277 = vand.u32 2147483647, %v275
    %v278 = vsel %vm125, %v276, 0.0
    %279 = vadd.xlane.f32.xlu0 %v278
    %v280 = vpop.xlane.xlu0 %279
    %v281 = vsel %vm125, %v277, 0.0
    %282 = vadd.xlane.f32.xlu0 %v281
    %v283 = vpop.xlane.xlu0 %282
    %vm284 = vcmp.gt.f32.partialorder %v280, 0.0
    %vm285 = vcmp.gt.f32.partialorder %v283, 0.0
    %v286 = vsel %vm284, 1, 0
    %v287 = vsel %vm285, 1, 0
    %v288 = vcvt.s32.f32 %v286
    %v289 = vcvt.s32.f32 %v287
    %v290 = vrot.slane %v288, 4
    %v291 = vadd.f32 %v288, %v290
    %v292 = vrot.slane %v291, 2
    %v293 = vadd.f32 %v291, %v292
    %v294 = vrot.slane %v293, 1
    %v295 = vadd.f32 %v293, %v294
    %v296 = vrot.slane %v289, 4
    %v297 = vadd.f32 %v289, %v296
    %v298 = vrot.slane %v297, 2
    %v299 = vadd.f32 %v297, %v298
    %v300 = vrot.slane %v299, 1
    %v301 = vadd.f32 %v299, %v300
    %v302 = vmax.f32 %v295, 1.0
    %v303 = vmax.f32 %v301, 1.0
    %v304 = vrcp.pop %v302
    %v305 = vmul.f32 %v302, %v304
    %v306 = vsub.f32 1.0, %v305
    %v307 = vmul.f32 %v304, %v306
    %v308 = vadd.f32 %v304, %v307
    %vm309 = vweird.f32 %v302
    %vm310 = vweird.f32 %v304
    %vm311 = vmor %vm309, %vm310
    %v312 = vsel %vm311, %v304, %v308
    %v313 = vand.u32 2147483647, %v302
    %vm314 = vcmp.eq.f32.partialorder %v313, 8.507059e+37
    %v315 = vand.u32 %v302, 2147483648
    %v316 = vor.u32 1.1754944e-38, %v315
    %v317 = vsel %vm314, %v316, %v312
    %v318 = vmul.f32 1.0, %v317
    %v319 = vrcp.pop %v303
    %v320 = vmul.f32 %v303, %v319
    %v321 = vsub.f32 1.0, %v320
    %v322 = vmul.f32 %v319, %v321
    %v323 = vadd.f32 %v319, %v322
    %vm324 = vweird.f32 %v303
    %vm325 = vweird.f32 %v319
    %vm326 = vmor %vm324, %vm325
    %v327 = vsel %vm326, %v319, %v323
    %v328 = vand.u32 2147483647, %v303
    %vm329 = vcmp.eq.f32.partialorder %v328, 8.507059e+37
    %v330 = vand.u32 %v303, 2147483648
    %v331 = vor.u32 1.1754944e-38, %v330
    %v332 = vsel %vm329, %v331, %v327
    %v333 = vmul.f32 1.0, %v332
    %v334 = vsel %vm125, %v274, 0.0
    %v335 = vrot.slane %v334, 4
    %v336 = vadd.f32 %v334, %v335
    %v337 = vrot.slane %v336, 2
    %v338 = vadd.f32 %v336, %v337
    %v339 = vrot.slane %v338, 1
    %v340 = vadd.f32 %v338, %v339
    %v341 = vsel %vm125, %v275, 0.0
    %v342 = vrot.slane %v341, 4
    %v343 = vadd.f32 %v341, %v342
    %v344 = vrot.slane %v343, 2
    %v345 = vadd.f32 %v343, %v344
    %v346 = vrot.slane %v345, 1
    %v347 = vadd.f32 %v345, %v346
    %v348 = vmul.f32 %v340, %v318
    %v349 = vmul.f32 %v347, %v333
    %v350 = vld [vmem:[#allocation8] sm:$0xff]
    %v351 = vld [vmem:[#allocation8 + $0x8] sm:$0xff]
    %v352 = vld [vmem:[#allocation8 + $0x10] sm:$0xff]
    %v353 = vld [vmem:[#allocation8 + $0x18] sm:$0xff]
    %v354 = vld [vmem:[#allocation10] sm:$0xff]
    %v355 = vld [vmem:[#allocation10 + $0x8] sm:$0xff]
    %v356 = vld [vmem:[#allocation10 + $0x10] sm:$0xff]
    %v357 = vld [vmem:[#allocation10 + $0x18] sm:$0xff]
    %vm360 = vcmask 1041409
    %v361 = vsel %vm360, %v273, %v272
    %v362 = vsel %vm125, %v361, 0
    %364 = vmatpush.msra.mxu0 0.0
    %365 = vmatpush.msra.mxu0 0.0
    %366 = vmatpush.msra.mxu0 0.0
    %367 = vmatpush.msra.mxu0 0.0
    %368 = vmatpush.msra.mxu0 0.0
    %369 = vmatpush.msra.mxu0 0.0
    %370 = vmatpush.msra.mxu0 0.0
    %371 = vmatpush.msra.mxu0 0.0
    %372 = vmatpush.msra.mxu0 0.0
    %373 = vmatpush.msra.mxu0 0.0
    %374 = vmatpush.msra.mxu0 0.0
    %375 = vmatpush.msra.mxu0 0.0
    %376 = vmatpush.msra.mxu0 %v357
    %377 = vmatpush.msra.mxu0 %v356
    %378 = vmatpush.msra.mxu0 %v355
    %379 = vmatpush.msra.mxu0 %v354
    %380 = vmatmul.f32.gmra.mxu0 %v362
    %v381 = vpop.f32.mrf.mxu0
    %v382 = vadd.f32 0.0, %v381
    %383 = vdwg.mxu0
    %v386 = vsel %vm360, %v197, %v196
    %v387 = vsel %vm125, %v386, 0
    %389 = vmatpush.msra.mxu0 0.0
    %390 = vmatpush.msra.mxu0 0.0
    %391 = vmatpush.msra.mxu0 0.0
    %392 = vmatpush.msra.mxu0 0.0
    %393 = vmatpush.msra.mxu0 0.0
    %394 = vmatpush.msra.mxu0 0.0
    %395 = vmatpush.msra.mxu0 0.0
    %396 = vmatpush.msra.mxu0 0.0
    %397 = vmatpush.msra.mxu0 0.0
    %398 = vmatpush.msra.mxu0 0.0
    %399 = vmatpush.msra.mxu0 0.0
    %400 = vmatpush.msra.mxu0 0.0
    %401 = vmatpush.msra.mxu0 %v353
    %402 = vmatpush.msra.mxu0 %v352
    %403 = vmatpush.msra.mxu0 %v351
    %404 = vmatpush.msra.mxu0 %v350
    %405 = vmatmul.f32.gmra.mxu0 %v387
    %v406 = vpop.f32.mrf.mxu0
    %v407 = vadd.f32 %v382, %v406
    %408 = vdwg.mxu0
    %v409 = vld [vmem:[#allocation11] sm:$0xff]
    %v410 = vld [vmem:[#allocation11 + $0x8] sm:$0xff]
    %v411 = vld [vmem:[#allocation11 + $0x10] sm:$0xff]
    %v412 = vld [vmem:[#allocation11 + $0x18] sm:$0xff]
    %v415 = vsel %vm360, %v349, %v348
    %v416 = vsel %vm125, %v415, 0
    %418 = vmatpush.msra.mxu0 0.0
    %419 = vmatpush.msra.mxu0 0.0
    %420 = vmatpush.msra.mxu0 0.0
    %421 = vmatpush.msra.mxu0 0.0
    %422 = vmatpush.msra.mxu0 0.0
    %423 = vmatpush.msra.mxu0 0.0
    %424 = vmatpush.msra.mxu0 0.0
    %425 = vmatpush.msra.mxu0 0.0
    %426 = vmatpush.msra.mxu0 0.0
    %427 = vmatpush.msra.mxu0 0.0
    %428 = vmatpush.msra.mxu0 0.0
    %429 = vmatpush.msra.mxu0 0.0
    %430 = vmatpush.msra.mxu0 %v412
    %431 = vmatpush.msra.mxu0 %v411
    %432 = vmatpush.msra.mxu0 %v410
    %433 = vmatpush.msra.mxu0 %v409
    %434 = vmatmul.f32.gmra.mxu0 %v416
    %v435 = vpop.f32.mrf.mxu0
    %v436 = vadd.f32 0.0, %v435
    %437 = vdwg.mxu0
    %v438 = vadd.f32 %v407, %v436
    %v439 = vld [vmem:[%s6] sm:$0x1]
    %v441 = vperm.slane %v439, 0
    %v443 = vadd.f32 %v438, %v441
    %v444 = vmax.f32 %v443, 0.0
    %vm445 = vcmask 517120
    %446 = vst.msk [vmem:[#allocation13] sm:$0x3] %vm445, %v444
    // Predicated region
    $region54: #{tpu_custom_call.1} parent=1 // pred_check
      _
    $region55: #{tpu_custom_call.1} parent=1 // pred_check_branch
      %448 = sbr.rel (0) target = $region57
    $region56: #{tpu_custom_call.1} parent=1 // pred_region
      %450 = vsyncadd [#allocation4], 0
      %s452 = sshll.u32 [#allocation13], 4
      %s453 = int_to_ptr.vmem [resolvable:$true] %s452
      %s454 = sshll.u32 %s7, 4
      %s455 = int_to_ptr.hbm [resolvable:$true] %s454
      %457 = dma.vmem_to_hbm [thread:$0]  %s453, 32, %s455, [#allocation4]
    $region57: #{tpu_custom_call.1} parent=1 // pred_fallthru
      _
    // Predicated region
    $region58: #{tpu_custom_call.1} parent=1 // pred_check
      _
    $region59: #{tpu_custom_call.1} parent=1 // pred_check_branch
      %459 = sbr.rel (0) target = $region61
    $region60: #{tpu_custom_call.1} parent=1 // pred_region
      %461 = dma.done [#allocation4], 32
    $region61: #{tpu_custom_call.1} parent=1 // pred_fallthru
      _
    %462 = vsyncpa [#allocation3], 1
    %463 = vsyncpa [#allocation6], 1
    %464 = vsyncpa [#allocation9], 1
    %465 = vsyncpa [#allocation12], 1
    %466 = vsyncpa [#allocation4], 1

</llo_original>
